<compile_context>
chip_gen: v6e
topology: v6e:2x2x1
jax: 0.10.0
libtpu: 0.0.40
codegen_flags: <defaults>
</compile_context>

<pallas_src>
import jax
import jax.numpy as jnp
import numpy as np
from jax.experimental import pallas as pl
from jax.experimental.pallas import tpu as pltpu

NEG_INF = float("-inf")


# ----------------------------------------------------------------------------
# Deterministic graph templates (plain numpy, buffer setup / glue).
# TODO(synk): exact transform_adjacency_matrix/self_matrix/nn_matrix/nnn_matrix
# sources were not provided; a standard lattice adjacency is used instead.
# ----------------------------------------------------------------------------
def _self_matrix(size: int) -> np.ndarray:
    n = size * size
    return np.eye(n, dtype=np.float32)


def _nn_matrix(size: int) -> np.ndarray:
    n = size * size
    a = np.zeros((n, n), dtype=np.float32)
    for r in range(size):
        for c in range(size):
            i = r * size + c
            for dr, dc in ((-1, 0), (1, 0), (0, -1), (0, 1)):
                rr, cc = r + dr, c + dc
                if 0 <= rr < size and 0 <= cc < size:
                    a[i, rr * size + cc] = 1.0
    return a


def _nnn_matrix(size: int) -> np.ndarray:
    n = size * size
    a = np.zeros((n, n), dtype=np.float32)
    for r in range(size):
        for c in range(size):
            i = r * size + c
            for dr, dc in ((-1, -1), (-1, 1), (1, -1), (1, 1)):
                rr, cc = r + dr, c + dc
                if 0 <= rr < size and 0 <= cc < size:
                    a[i, rr * size + cc] = 1.0
    return a


def _transform_adjacency_matrix(a: np.ndarray, _unused: bool, mode: str) -> np.ndarray:
    if mode == "sum":
        return a.astype(np.float32)
    if mode == "avg+1":
        deg = a.sum(axis=-1, keepdims=True)
        return (a / (deg + 1.0)).astype(np.float32)
    raise ValueError(mode)


# ----------------------------------------------------------------------------
# Pallas kernel: lane-dense (rows, NN_pad) slabs, mask-on-product to -inf.
# ----------------------------------------------------------------------------
def _graph_mask_attn_kernel(m_ref,   # VMEM (1, NN_pad)  combined graph template (f32)
                            x_ref,   # VMEM (TB, NN_pad) attention-score rows
                            o_ref):  # VMEM (TB, NN_pad)
    # einsum('ij,bhij->bhij', M, x) == row-broadcast elementwise multiply in
    # the flattened (rows, N*N) layout (M broadcast across sublanes).
    # Multiply in f32 (v5e has no bf16 VALU), cast to the output dtype before
    # the zero check so the -inf mask matches the caller-visible precision.
    y = (m_ref[...] * x_ref[...].astype(jnp.float32)).astype(o_ref.dtype)
    # transform_torch_zero_matrix_to_neg_infinity: zeros -> -inf.
    o_ref[...] = jnp.where(y == 0.0, NEG_INF, y)


# ----------------------------------------------------------------------------
# Generation-aware tiling helpers.
# ----------------------------------------------------------------------------
def _round_up(x: int, m: int) -> int:
    return (x + m - 1) // m * m


def _vmem_budget_bytes() -> int:
    """Usable scoped-VMEM budget: ~3/4 of physical capacity (>=32 MiB)."""
    try:
        cap = int(pltpu.get_tpu_info().vmem_capacity_bytes)   # 64 MiB on v7x, 128 MiB v5e/v6e
    except Exception:
        cap = 64 << 20                                        # safe lower bound
    return max(32 << 20, (cap * 3) // 4)


def _pick_block_rows(rows: int, row_bytes: int, align: int, vmem_budget: int) -> int:
    """Row-block size: VMEM-bounded, `align`-aligned, with >=2 grid steps
    whenever a legal split exists (v7x megacore sharding of the parallel axis).

    VMEM footprint per step ~= 4 * block (double-buffered in + out) + tiny M,
    so the per-block target is ~budget/5, capped at 12 MiB (elementwise tiling
    shows diminishing returns past ~8-12 MiB per the measured v6e scaling).
    """
    target = min(12 << 20, max(row_bytes * align, (vmem_budget - (2 << 20)) // 5))
    tb = max(align, (target // row_bytes) // align * align)
    tb = min(tb, _round_up(rows, align))
    # Prefer >=2 grid steps when a split is legal and the data is non-trivial:
    # the split costs one extra ~0.35 us step but uses both TCs on v7x.
    if tb >= rows and rows > align and rows * row_bytes > (1 << 20):
        half = _round_up(pl.cdiv(rows, 2), align)
        tb = min(tb, half)
    return max(align, tb)


# ----------------------------------------------------------------------------
# Wrapper.
# ----------------------------------------------------------------------------
def graph_mask_attention(x: jax.Array,
                         factors: jax.Array,
                         center: jax.Array,
                         nn_m: jax.Array,
                         nnn_m: jax.Array,
                         *, graph_layer: str = "symm_nn") -> jax.Array:
    """x: (B, H, N, N); factors: (3,) f32; templates: (N, N) f32.

    Output dtype == x.dtype.  When N*N is already a multiple of 128, x's HBM
    buffer is aliased to the output (read-modify-write); do not rely on x's
    contents afterwards if you donate it.
    """
    B, H, N, N2 = x.shape
    assert N == N2 and center.shape == (N, N)
    NN = N * N
    rows = B * H
    out_dtype = x.dtype
    itemsize = jnp.dtype(out_dtype).itemsize
    # Sub-32-bit dtypes pack along sublanes: row tiles must be multiples of
    # the packed sublane count (8 for f32, 16 for bf16, 32 for 8-bit).
    align = max(8, 32 // max(1, itemsize))

    # Hoist M = f0*center + f1*nn (+ f2*nnn): a single tiny (N, N) computation
    # done once here; only the combined M is staged into VMEM (and it stays
    # resident across all grid steps).
    m = factors[0].astype(jnp.float32) * center.astype(jnp.float32)
    if graph_layer in ("symm_nn", "symm_nnn"):
        m = m + factors[1].astype(jnp.float32) * nn_m.astype(jnp.float32)
    if graph_layer == "symm_nnn":
        m = m + factors[2].astype(jnp.float32) * nnn_m.astype(jnp.float32)
    m2d = m.reshape(1, NN)

    # Lane-dense flattening in the caller's dtype (no forced f32 upcast: keeps
    # bf16 at half the HBM traffic and does not defeat input/output aliasing).
    x2d = x.reshape(rows, NN)

    # Lane dim must be a multiple of 128 for full-width vector stores; pad with
    # zeros otherwise (padded lanes are sliced off after the call).
    pad = (-NN) % 128
    nn_p = NN + pad
    if pad:
        x2d = jnp.pad(x2d, ((0, 0), (0, pad)))
        m2d = jnp.pad(m2d, ((0, 0), (0, pad)))

    vmem_budget = _vmem_budget_bytes()
    row_bytes = nn_p * itemsize
    tb = _pick_block_rows(rows, row_bytes, align, vmem_budget)
    grid = (pl.cdiv(rows, tb),)

    # Aliasing x's HBM buffer is only valid when no padding copy was made.
    io_aliases = {} if pad else {1: 0}

    out2d = pl.pallas_call(
        _graph_mask_attn_kernel,
        out_shape=jax.ShapeDtypeStruct((rows, nn_p), out_dtype),
        grid_spec=pltpu.PrefetchScalarGridSpec(
            num_scalar_prefetch=0,
            grid=grid,
            in_specs=[
                # Combined template: constant block index -> VMEM-resident
                # across all grid steps (no re-DMA).  Kept (1, NN): the
                # sublane-broadcast mul sits in ample VALU slack while the
                # kernel is HBM-bound.
                pl.BlockSpec((1, nn_p), lambda i: (0, 0)),
                # Attention-score rows, multi-MiB cdiv-tiled blocks.
                pl.BlockSpec((tb, nn_p), lambda i: (i, 0)),
            ],
            out_specs=pl.BlockSpec((tb, nn_p), lambda i: (i, 0)),
        ),
        compiler_params=pltpu.CompilerParams(
            dimension_semantics=("parallel",),
            vmem_limit_bytes=int(vmem_budget),
        ),
        input_output_aliases=io_aliases,
    )(m2d, x2d)

    if pad:
        out2d = out2d[:, :NN]
    return out2d.reshape(B, H, N, N)


# ----------------------------------------------------------------------------
# Pure-JAX reference for a correctness check.
# ----------------------------------------------------------------------------
def _reference(x, factors, center, nn_m, nnn_m, graph_layer="symm_nn"):
    m = factors[0] * center
    if graph_layer in ("symm_nn", "symm_nnn"):
        m = m + factors[1] * nn_m
    if graph_layer == "symm_nnn":
        m = m + factors[2] * nnn_m
    y = jnp.einsum("ij,bhij->bhij", m, x.astype(jnp.float32)).astype(x.dtype)
    return jnp.where(y == 0.0, NEG_INF, y)


if __name__ == "__main__":
    size = 8                      # 8x8 lattice -> N = 64 graph nodes
    N = size * size
    B, H = 2, 4
    graph_layer = "symm_nn"

    # Deterministic non-trainable templates (GraphMask.__init__,
    # average_graph_connections=False -> 'sum' mode).
    center = jnp.asarray(_transform_adjacency_matrix(_self_matrix(size), False, "sum"))
    nn_m   = jnp.asarray(_transform_adjacency_matrix(_nn_matrix(size),   False, "sum"))
    nnn_m  = jnp.asarray(_transform_adjacency_matrix(_nnn_matrix(size),  False, "sum"))

    # Trainable factors: nn.init.normal_(torch.zeros(3)) -> deterministic normal.
    key = jax.random.PRNGKey(0)
    k_fac, k_x = jax.random.split(key)
    factors = jax.random.normal(k_fac, (3,), dtype=jnp.float32)

    # Example attention-score input x: (B, H, N, N).
    x = jax.random.normal(k_x, (B, H, N, N), dtype=jnp.float32)

    # Reference computed first: the kernel may alias x's buffer to its output.
    ref = jax.block_until_ready(_reference(x, factors, center, nn_m, nnn_m,
                                           graph_layer))

    out = graph_mask_attention(x, factors, center, nn_m, nnn_m,
                               graph_layer=graph_layer)
    out = jax.block_until_ready(out)

    finite = jnp.isfinite(ref)
    assert bool(jnp.array_equal(finite, jnp.isfinite(out)))
    assert bool(jnp.allclose(jnp.where(finite, out, 0.0),
                             jnp.where(finite, ref, 0.0),
                             atol=1e-5, rtol=1e-5))

    print("KERNEL_OK")
</pallas_src>

<mosaic_0001>
module attributes {stable_mosaic.version = 11 : i64} {
  func.func @_graph_mask_attn_kernel(%arg0: i32, %arg1: memref<1x4096xf32, #tpu.memory_space<vmem>>, %arg2: memref<8x4096xf32, #tpu.memory_space<vmem>>, %arg3: memref<8x4096xf32, #tpu.memory_space<vmem>>) attributes {dimension_semantics = [#tpu.dimension_semantics<parallel>], iteration_bounds = array<i64: 1>, scalar_prefetch = 0 : i64, scratch_operands = 0 : i64, tpu.core_type = #tpu.core_type<tc>, window_params = [{pipeline_mode = #tpu.pipeline_mode<synchronous>, transform_indices = @transform_0, window_bounds = array<i64: 1, 4096>}, {transform_indices = @transform_1, window_bounds = array<i64: 8, 4096>}, {transform_indices = @transform_2, window_bounds = array<i64: 8, 4096>}]} {
    %c0 = arith.constant 0 : index
    %c0_0 = arith.constant 0 : index
    %0 = vector.load %arg1[%c0, %c0_0] : memref<1x4096xf32, #tpu.memory_space<vmem>>, vector<1x4096xf32>
    %c0_1 = arith.constant 0 : index
    %c0_2 = arith.constant 0 : index
    %1 = vector.load %arg2[%c0_1, %c0_2] : memref<8x4096xf32, #tpu.memory_space<vmem>>, vector<8x4096xf32>
    %2 = vector.broadcast %0 : vector<1x4096xf32> to vector<8x4096xf32>
    %3 = arith.mulf %2, %1 : vector<8x4096xf32>
    %cst = arith.constant 0.000000e+00 : f32
    %4 = vector.broadcast %cst : f32 to vector<8x4096xf32>
    %5 = arith.cmpf oeq, %3, %4 : vector<8x4096xf32>
    %cst_3 = arith.constant 0xFF800000 : f32
    %6 = vector.broadcast %cst_3 : f32 to vector<8x4096xf32>
    %7 = arith.select %5, %6, %3 : vector<8x4096xi1>, vector<8x4096xf32>
    %c0_4 = arith.constant 0 : index
    %c0_5 = arith.constant 0 : index
    %8 = vector.load %arg3[%c0_4, %c0_5] : memref<8x4096xf32, #tpu.memory_space<vmem>>, vector<8x4096xf32>
    tpu.vector_store %arg3[%c0_4, %c0_5], %7 {strides = array<i32>} : memref<8x4096xf32, #tpu.memory_space<vmem>>, vector<8x4096xf32>,
    return
  }
  func.func @transform_0(%arg0: i32) -> (i32, i32) {
    %c0_i32 = arith.constant 0 : i32
    %c0_i32_0 = arith.constant 0 : i32
    %c0_i32_1 = arith.constant 0 : i32
    return %c0_i32, %c0_i32_0 : i32, i32
  }
  func.func @transform_1(%arg0: i32) -> (i32, i32) {
    %c0_i32 = arith.constant 0 : i32
    %c0_i32_0 = arith.constant 0 : i32
    return %arg0, %c0_i32 : i32, i32
  }
  func.func @transform_2(%arg0: i32) -> (i32, i32) {
    %c0_i32 = arith.constant 0 : i32
    %c0_i32_0 = arith.constant 0 : i32
    return %arg0, %c0_i32 : i32, i32
  }
}

</mosaic_0001>

<llo_original>
// kernel: tpu_custom_call.1
$region0: #{tpu_custom_call.1}
  #allocation0 [shape = 'u32[]', space=smem, size = 0x4, offset = 0x4, fixed_abs, tag = 'smem constant byte address 0x4 - core index']
  #allocation1 [shape = 'u32[144,128]{1,0:T(1,128)}', space=vmem, size = 0x12000, scoped, tag = 'internal scratch']
  %s0 = inlined_call_operand.vmem [shape: f32[1,4096], index: 0, kind: input, shape index: {}]
  %s1 = inlined_call_operand.hbm [shape: f32[8,4096], index: 1, kind: input, shape index: {}, may-alias: {1,2}]
  %s2 = inlined_call_operand.hbm [shape: f32[8,4096], index: 2, kind: output, shape index: {}, may-alias: {1,2}]
  %s3 = sld [smem:[#allocation0]]
  $region22: #{tpu_custom_call.1} parent=0
    _
  %s5 = ssub.s32 1, %s3
  %s6 = scalar_select 0, %s5, %s3
  $region1: #{tpu_custom_call.1} parent=0
    #allocation2 [shape = 'u8[131072]{0}', space=vmem, size = 0x20000, scoped, tag = 'input window, operand 1, single buffered']
    #allocation3 [shape = 's32[1]{0}', space=sflag, size = 0x4, scoped, tag = 'scoped memory for tpu_custom_call.1']
    #allocation4 [shape = 's32[1]{0}', space=sflag, size = 0x4, scoped, tag = 'scoped memory for tpu_custom_call.1']
    #allocation5 [shape = 'u8[131072]{0}', space=vmem, size = 0x20000, scoped, tag = 'output window, operand 0, single buffered']
    %7 = vsyncpa [#allocation3], 0
    %8 = vsyncpa [#allocation4], 0
    // Predicated region
    $region2: #{tpu_custom_call.1} parent=1 // pred_check
      _
    $region3: #{tpu_custom_call.1} parent=1 // pred_check_branch
      %10 = sbr.rel (0) target = $region5
    $region4: #{tpu_custom_call.1} parent=1 // pred_region
      _
    $region5: #{tpu_custom_call.1} parent=1 // pred_fallthru
      _
    // Predicated region
    $region6: #{tpu_custom_call.1} parent=1 // pred_check
      _
    $region7: #{tpu_custom_call.1} parent=1 // pred_check_branch
      %12 = sbr.rel (0) target = $region9
    $region8: #{tpu_custom_call.1} parent=1 // pred_region
      %s14 = ssub.s32 4096, 4096
      %15 = vsyncadd [#allocation3], %s14
      %s17 = sshll.u32 [#allocation2], 4
      %s18 = int_to_ptr.vmem [resolvable:$true] %s17
      %20 = dma.hbm_to_vmem [thread:$0]  %s1, 4096, %s18, [#allocation3]
    $region9: #{tpu_custom_call.1} parent=1 // pred_fallthru
      _
    // Predicated region
    $region10: #{tpu_custom_call.1} parent=1 // pred_check
      _
    $region11: #{tpu_custom_call.1} parent=1 // pred_check_branch
      %22 = sbr.rel (0) target = $region13
    $region12: #{tpu_custom_call.1} parent=1 // pred_region
      %23 = dma.done [#allocation3], 4096
    $region13: #{tpu_custom_call.1} parent=1 // pred_fallthru
      _
    %v24 = vld [vmem:[%s0] sm:$0xff]
    %v25 = vld [vmem:[%s0 + $0x8] sm:$0xff]
    %v26 = vld [vmem:[%s0 + $0x10] sm:$0xff]
    %v27 = vld [vmem:[%s0 + $0x18] sm:$0xff]
    %v28 = vld [vmem:[#allocation2] sm:$0xff]
    %v29 = vld [vmem:[#allocation2 + $0x8] sm:$0xff]
    %v30 = vld [vmem:[#allocation2 + $0x10] sm:$0xff]
    %v31 = vld [vmem:[#allocation2 + $0x18] sm:$0xff]
    %v32 = vld [vmem:[#allocation2 + $0x20] sm:$0xff]
    %v33 = vld [vmem:[#allocation2 + $0x28] sm:$0xff]
    %v34 = vld [vmem:[#allocation2 + $0x30] sm:$0xff]
    %v35 = vld [vmem:[#allocation2 + $0x38] sm:$0xff]
    %v36 = vld [vmem:[#allocation2 + $0x40] sm:$0xff]
    %v37 = vld [vmem:[#allocation2 + $0x48] sm:$0xff]
    %v38 = vld [vmem:[#allocation2 + $0x50] sm:$0xff]
    %v39 = vld [vmem:[#allocation2 + $0x58] sm:$0xff]
    %v40 = vld [vmem:[#allocation2 + $0x60] sm:$0xff]
    %v41 = vld [vmem:[#allocation2 + $0x68] sm:$0xff]
    %v42 = vld [vmem:[#allocation2 + $0x70] sm:$0xff]
    %v43 = vld [vmem:[#allocation2 + $0x78] sm:$0xff]
    %v44 = vld [vmem:[#allocation2 + $0x80] sm:$0xff]
    %v45 = vld [vmem:[#allocation2 + $0x88] sm:$0xff]
    %v46 = vld [vmem:[#allocation2 + $0x90] sm:$0xff]
    %v47 = vld [vmem:[#allocation2 + $0x98] sm:$0xff]
    %v48 = vld [vmem:[#allocation2 + $0xa0] sm:$0xff]
    %v49 = vld [vmem:[#allocation2 + $0xa8] sm:$0xff]
    %v50 = vld [vmem:[#allocation2 + $0xb0] sm:$0xff]
    %v51 = vld [vmem:[#allocation2 + $0xb8] sm:$0xff]
    %v52 = vld [vmem:[#allocation2 + $0xc0] sm:$0xff]
    %v53 = vld [vmem:[#allocation2 + $0xc8] sm:$0xff]
    %v54 = vld [vmem:[#allocation2 + $0xd0] sm:$0xff]
    %v55 = vld [vmem:[#allocation2 + $0xd8] sm:$0xff]
    %v56 = vld [vmem:[#allocation2 + $0xe0] sm:$0xff]
    %v57 = vld [vmem:[#allocation2 + $0xe8] sm:$0xff]
    %v58 = vld [vmem:[#allocation2 + $0xf0] sm:$0xff]
    %v59 = vld [vmem:[#allocation2 + $0xf8] sm:$0xff]
    %v64 = vlaneseq
    %v65 = vshrl.u32 %v64, 7
    %v66 = vsub.s32 0, %v65
    %v67 = vrot.slane %v24, %v66
    %v68 = vlaneseq
    %v69 = vshrl.u32 %v68, 7
    %v70 = vsub.s32 1, %v69
    %v71 = vrot.slane %v24, %v70
    %v72 = vlaneseq
    %v73 = vshrl.u32 %v72, 7
    %v74 = vsub.s32 2, %v73
    %v75 = vrot.slane %v24, %v74
    %v76 = vlaneseq
    %v77 = vshrl.u32 %v76, 7
    %v78 = vsub.s32 3, %v77
    %v79 = vrot.slane %v24, %v78
    %v80 = vlaneseq
    %v81 = vshrl.u32 %v80, 7
    %v82 = vsub.s32 4, %v81
    %v83 = vrot.slane %v24, %v82
    %v84 = vlaneseq
    %v85 = vshrl.u32 %v84, 7
    %v86 = vsub.s32 5, %v85
    %v87 = vrot.slane %v24, %v86
    %v88 = vlaneseq
    %v89 = vshrl.u32 %v88, 7
    %v90 = vsub.s32 6, %v89
    %v91 = vrot.slane %v24, %v90
    %v92 = vlaneseq
    %v93 = vshrl.u32 %v92, 7
    %v94 = vsub.s32 7, %v93
    %v95 = vrot.slane %v24, %v94
    %v96 = vlaneseq
    %v97 = vshrl.u32 %v96, 7
    %v98 = vsub.s32 0, %v97
    %v99 = vrot.slane %v25, %v98
    %v100 = vlaneseq
    %v101 = vshrl.u32 %v100, 7
    %v102 = vsub.s32 1, %v101
    %v103 = vrot.slane %v25, %v102
    %v104 = vlaneseq
    %v105 = vshrl.u32 %v104, 7
    %v106 = vsub.s32 2, %v105
    %v107 = vrot.slane %v25, %v106
    %v108 = vlaneseq
    %v109 = vshrl.u32 %v108, 7
    %v110 = vsub.s32 3, %v109
    %v111 = vrot.slane %v25, %v110
    %v112 = vlaneseq
    %v113 = vshrl.u32 %v112, 7
    %v114 = vsub.s32 4, %v113
    %v115 = vrot.slane %v25, %v114
    %v116 = vlaneseq
    %v117 = vshrl.u32 %v116, 7
    %v118 = vsub.s32 5, %v117
    %v119 = vrot.slane %v25, %v118
    %v120 = vlaneseq
    %v121 = vshrl.u32 %v120, 7
    %v122 = vsub.s32 6, %v121
    %v123 = vrot.slane %v25, %v122
    %v124 = vlaneseq
    %v125 = vshrl.u32 %v124, 7
    %v126 = vsub.s32 7, %v125
    %v127 = vrot.slane %v25, %v126
    %v128 = vlaneseq
    %v129 = vshrl.u32 %v128, 7
    %v130 = vsub.s32 0, %v129
    %v131 = vrot.slane %v26, %v130
    %v132 = vlaneseq
    %v133 = vshrl.u32 %v132, 7
    %v134 = vsub.s32 1, %v133
    %v135 = vrot.slane %v26, %v134
    %v136 = vlaneseq
    %v137 = vshrl.u32 %v136, 7
    %v138 = vsub.s32 2, %v137
    %v139 = vrot.slane %v26, %v138
    %v140 = vlaneseq
    %v141 = vshrl.u32 %v140, 7
    %v142 = vsub.s32 3, %v141
    %v143 = vrot.slane %v26, %v142
    %v144 = vlaneseq
    %v145 = vshrl.u32 %v144, 7
    %v146 = vsub.s32 4, %v145
    %v147 = vrot.slane %v26, %v146
    %v148 = vlaneseq
    %v149 = vshrl.u32 %v148, 7
    %v150 = vsub.s32 5, %v149
    %v151 = vrot.slane %v26, %v150
    %v152 = vlaneseq
    %v153 = vshrl.u32 %v152, 7
    %v154 = vsub.s32 6, %v153
    %v155 = vrot.slane %v26, %v154
    %v156 = vlaneseq
    %v157 = vshrl.u32 %v156, 7
    %v158 = vsub.s32 7, %v157
    %v159 = vrot.slane %v26, %v158
    %v160 = vlaneseq
    %v161 = vshrl.u32 %v160, 7
    %v162 = vsub.s32 0, %v161
    %v163 = vrot.slane %v27, %v162
    %v164 = vlaneseq
    %v165 = vshrl.u32 %v164, 7
    %v166 = vsub.s32 1, %v165
    %v167 = vrot.slane %v27, %v166
    %v168 = vlaneseq
    %v169 = vshrl.u32 %v168, 7
    %v170 = vsub.s32 2, %v169
    %v171 = vrot.slane %v27, %v170
    %v172 = vlaneseq
    %v173 = vshrl.u32 %v172, 7
    %v174 = vsub.s32 3, %v173
    %v175 = vrot.slane %v27, %v174
    %v176 = vlaneseq
    %v177 = vshrl.u32 %v176, 7
    %v178 = vsub.s32 4, %v177
    %v179 = vrot.slane %v27, %v178
    %v180 = vlaneseq
    %v181 = vshrl.u32 %v180, 7
    %v182 = vsub.s32 5, %v181
    %v183 = vrot.slane %v27, %v182
    %v184 = vlaneseq
    %v185 = vshrl.u32 %v184, 7
    %v186 = vsub.s32 6, %v185
    %v187 = vrot.slane %v27, %v186
    %v188 = vlaneseq
    %v189 = vshrl.u32 %v188, 7
    %v190 = vsub.s32 7, %v189
    %v191 = vrot.slane %v27, %v190
    %v224 = vmul.f32 %v67, %v28
    %v225 = vmul.f32 %v71, %v29
    %v226 = vmul.f32 %v75, %v30
    %v227 = vmul.f32 %v79, %v31
    %v228 = vmul.f32 %v83, %v32
    %v229 = vmul.f32 %v87, %v33
    %v230 = vmul.f32 %v91, %v34
    %v231 = vmul.f32 %v95, %v35
    %v232 = vmul.f32 %v99, %v36
    %v233 = vmul.f32 %v103, %v37
    %v234 = vmul.f32 %v107, %v38
    %v235 = vmul.f32 %v111, %v39
    %v236 = vmul.f32 %v115, %v40
    %v237 = vmul.f32 %v119, %v41
    %v238 = vmul.f32 %v123, %v42
    %v239 = vmul.f32 %v127, %v43
    %v240 = vmul.f32 %v131, %v44
    %v241 = vmul.f32 %v135, %v45
    %v242 = vmul.f32 %v139, %v46
    %v243 = vmul.f32 %v143, %v47
    %v244 = vmul.f32 %v147, %v48
    %v245 = vmul.f32 %v151, %v49
    %v246 = vmul.f32 %v155, %v50
    %v247 = vmul.f32 %v159, %v51
    %v248 = vmul.f32 %v163, %v52
    %v249 = vmul.f32 %v167, %v53
    %v250 = vmul.f32 %v171, %v54
    %v251 = vmul.f32 %v175, %v55
    %v252 = vmul.f32 %v179, %v56
    %v253 = vmul.f32 %v183, %v57
    %v254 = vmul.f32 %v187, %v58
    %v255 = vmul.f32 %v191, %v59
    %vm256 = vcmp.eq.f32.partialorder %v224, 0.0
    %vm257 = vcmp.eq.f32.partialorder %v225, 0.0
    %vm258 = vcmp.eq.f32.partialorder %v226, 0.0
    %vm259 = vcmp.eq.f32.partialorder %v227, 0.0
    %vm260 = vcmp.eq.f32.partialorder %v228, 0.0
    %vm261 = vcmp.eq.f32.partialorder %v229, 0.0
    %vm262 = vcmp.eq.f32.partialorder %v230, 0.0
    %vm263 = vcmp.eq.f32.partialorder %v231, 0.0
    %vm264 = vcmp.eq.f32.partialorder %v232, 0.0
    %vm265 = vcmp.eq.f32.partialorder %v233, 0.0
    %vm266 = vcmp.eq.f32.partialorder %v234, 0.0
    %vm267 = vcmp.eq.f32.partialorder %v235, 0.0
    %vm268 = vcmp.eq.f32.partialorder %v236, 0.0
    %vm269 = vcmp.eq.f32.partialorder %v237, 0.0
    %vm270 = vcmp.eq.f32.partialorder %v238, 0.0
    %vm271 = vcmp.eq.f32.partialorder %v239, 0.0
    %vm272 = vcmp.eq.f32.partialorder %v240, 0.0
    %vm273 = vcmp.eq.f32.partialorder %v241, 0.0
    %vm274 = vcmp.eq.f32.partialorder %v242, 0.0
    %vm275 = vcmp.eq.f32.partialorder %v243, 0.0
    %vm276 = vcmp.eq.f32.partialorder %v244, 0.0
    %vm277 = vcmp.eq.f32.partialorder %v245, 0.0
    %vm278 = vcmp.eq.f32.partialorder %v246, 0.0
    %vm279 = vcmp.eq.f32.partialorder %v247, 0.0
    %vm280 = vcmp.eq.f32.partialorder %v248, 0.0
    %vm281 = vcmp.eq.f32.partialorder %v249, 0.0
    %vm282 = vcmp.eq.f32.partialorder %v250, 0.0
    %vm283 = vcmp.eq.f32.partialorder %v251, 0.0
    %vm284 = vcmp.eq.f32.partialorder %v252, 0.0
    %vm285 = vcmp.eq.f32.partialorder %v253, 0.0
    %vm286 = vcmp.eq.f32.partialorder %v254, 0.0
    %vm287 = vcmp.eq.f32.partialorder %v255, 0.0
    %v288 = vsel %vm256, -inf, %v224
    %v289 = vsel %vm257, -inf, %v225
    %v290 = vsel %vm258, -inf, %v226
    %v291 = vsel %vm259, -inf, %v227
    %v292 = vsel %vm260, -inf, %v228
    %v293 = vsel %vm261, -inf, %v229
    %v294 = vsel %vm262, -inf, %v230
    %v295 = vsel %vm263, -inf, %v231
    %v296 = vsel %vm264, -inf, %v232
    %v297 = vsel %vm265, -inf, %v233
    %v298 = vsel %vm266, -inf, %v234
    %v299 = vsel %vm267, -inf, %v235
    %v300 = vsel %vm268, -inf, %v236
    %v301 = vsel %vm269, -inf, %v237
    %v302 = vsel %vm270, -inf, %v238
    %v303 = vsel %vm271, -inf, %v239
    %v304 = vsel %vm272, -inf, %v240
    %v305 = vsel %vm273, -inf, %v241
    %v306 = vsel %vm274, -inf, %v242
    %v307 = vsel %vm275, -inf, %v243
    %v308 = vsel %vm276, -inf, %v244
    %v309 = vsel %vm277, -inf, %v245
    %v310 = vsel %vm278, -inf, %v246
    %v311 = vsel %vm279, -inf, %v247
    %v312 = vsel %vm280, -inf, %v248
    %v313 = vsel %vm281, -inf, %v249
    %v314 = vsel %vm282, -inf, %v250
    %v315 = vsel %vm283, -inf, %v251
    %v316 = vsel %vm284, -inf, %v252
    %v317 = vsel %vm285, -inf, %v253
    %v318 = vsel %vm286, -inf, %v254
    %v319 = vsel %vm287, -inf, %v255
    %320 = vst [vmem:[#allocation5] sm:$0xff] %v288
    %321 = vst [vmem:[#allocation5 + $0x8] sm:$0xff] %v289
    %322 = vst [vmem:[#allocation5 + $0x10] sm:$0xff] %v290
    %323 = vst [vmem:[#allocation5 + $0x18] sm:$0xff] %v291
    %324 = vst [vmem:[#allocation5 + $0x20] sm:$0xff] %v292
    %325 = vst [vmem:[#allocation5 + $0x28] sm:$0xff] %v293
    %326 = vst [vmem:[#allocation5 + $0x30] sm:$0xff] %v294
    %327 = vst [vmem:[#allocation5 + $0x38] sm:$0xff] %v295
    %328 = vst [vmem:[#allocation5 + $0x40] sm:$0xff] %v296
    %329 = vst [vmem:[#allocation5 + $0x48] sm:$0xff] %v297
    %330 = vst [vmem:[#allocation5 + $0x50] sm:$0xff] %v298
    %331 = vst [vmem:[#allocation5 + $0x58] sm:$0xff] %v299
    %332 = vst [vmem:[#allocation5 + $0x60] sm:$0xff] %v300
    %333 = vst [vmem:[#allocation5 + $0x68] sm:$0xff] %v301
    %334 = vst [vmem:[#allocation5 + $0x70] sm:$0xff] %v302
    %335 = vst [vmem:[#allocation5 + $0x78] sm:$0xff] %v303
    %336 = vst [vmem:[#allocation5 + $0x80] sm:$0xff] %v304
    %337 = vst [vmem:[#allocation5 + $0x88] sm:$0xff] %v305
    %338 = vst [vmem:[#allocation5 + $0x90] sm:$0xff] %v306
    %339 = vst [vmem:[#allocation5 + $0x98] sm:$0xff] %v307
    %340 = vst [vmem:[#allocation5 + $0xa0] sm:$0xff] %v308
    %341 = vst [vmem:[#allocation5 + $0xa8] sm:$0xff] %v309
    %342 = vst [vmem:[#allocation5 + $0xb0] sm:$0xff] %v310
    %343 = vst [vmem:[#allocation5 + $0xb8] sm:$0xff] %v311
    %344 = vst [vmem:[#allocation5 + $0xc0] sm:$0xff] %v312
    %345 = vst [vmem:[#allocation5 + $0xc8] sm:$0xff] %v313
    %346 = vst [vmem:[#allocation5 + $0xd0] sm:$0xff] %v314
    %347 = vst [vmem:[#allocation5 + $0xd8] sm:$0xff] %v315
    %348 = vst [vmem:[#allocation5 + $0xe0] sm:$0xff] %v316
    %349 = vst [vmem:[#allocation5 + $0xe8] sm:$0xff] %v317
    %350 = vst [vmem:[#allocation5 + $0xf0] sm:$0xff] %v318
    %351 = vst [vmem:[#allocation5 + $0xf8] sm:$0xff] %v319
    // Predicated region
    $region14: #{tpu_custom_call.1} parent=1 // pred_check
      _
    $region15: #{tpu_custom_call.1} parent=1 // pred_check_branch
      %353 = sbr.rel (0) target = $region17
    $region16: #{tpu_custom_call.1} parent=1 // pred_region
      %s355 = ssub.s32 4096, 4096
      %356 = vsyncadd [#allocation4], %s355
      %s358 = sshll.u32 [#allocation5], 4
      %s359 = int_to_ptr.vmem [resolvable:$true] %s358
      %361 = dma.vmem_to_hbm [thread:$0]  %s359, 4096, %s2, [#allocation4]
    $region17: #{tpu_custom_call.1} parent=1 // pred_fallthru
      _
    // Predicated region
    $region18: #{tpu_custom_call.1} parent=1 // pred_check
      _
    $region19: #{tpu_custom_call.1} parent=1 // pred_check_branch
      %363 = sbr.rel (0) target = $region21
    $region20: #{tpu_custom_call.1} parent=1 // pred_region
      %364 = dma.done [#allocation4], 4096
    $region21: #{tpu_custom_call.1} parent=1 // pred_fallthru
      _
    %365 = vsyncpa [#allocation3], 1
    %366 = vsyncpa [#allocation4], 1

</llo_original>
